<compile_context>
chip_gen: v6e
topology: v6e:2x2x1
jax: 0.10.0
libtpu: 0.0.40
codegen_flags: <defaults>
</compile_context>

<pallas_src>
from functools import partial

import jax
import jax.numpy as jnp
from jax.experimental import pallas as pl
from jax.experimental.pallas import tpu as pltpu


def _complex_conv2d_gemm_kernel(x_ref, w_ref, b_ref, o_ref):
    """One (batch, spatial-tile) grid step: out = X_patches @ W_packed + b.

    x_ref: (1, TM, K)     bf16 im2col patches for this tile (K = KH*KW*2*C_in)
    w_ref: (K, Cpad)      bf16 packed complex weights (constant block, MXU-stationary RHS)
    b_ref: (1, Cpad)      f32 combined biases (zero-padded to Cpad)
    o_ref: (1, TM, Cpad)  f32 lane-dense output tile (cols = [real outs | imag outs | pad])
    """
    y = jnp.dot(x_ref[0], w_ref[...], preferred_element_type=jnp.float32)
    o_ref[...] = (y + b_ref[...]).astype(o_ref.dtype)[None]


def _round_up(x, m):
    return -(-x // m) * m


def _vmem_budget():
    """(vmem_limit_bytes, per-step block-byte budget) derived from chip VMEM."""
    try:
        cap = int(pltpu.get_tpu_info().vmem_capacity_bytes)
    except Exception:
        cap = 64 * 1024 * 1024            # conservative fallback (v7x per-core VMEM)
    limit = min((cap * 3) // 4, 100 * 1024 * 1024)
    return limit, limit // 2


def _choose_tile(M, K, Cpad, block_budget):
    """Largest multiple-of-128 spatial tile TM fitting the VMEM block budget,
    keeping >= 2 tiles when there is enough work (pipelining / megacore)."""
    per_row = 2 * (K * 2 + Cpad * 4)        # double-buffered bf16 patches + f32 out, per M-row
    fixed = 2 * (K * Cpad * 2 + Cpad * 4)   # resident packed weights + bias (counted x2)
    avail = max(block_budget - fixed, 0)
    tm = max(128, (avail // per_row) // 128 * 128)
    tm = min(tm, 2048)
    m128 = _round_up(M, 128)
    if m128 >= 256:
        tm = min(tm, max(128, (m128 // 2) // 128 * 128))   # keep >= 2 spatial tiles
    else:
        tm = 128
    if tm >= 512:
        tm = (tm // 256) * 256              # 256-wide-friendly tiles for v6e/v7x MXU
    return tm


@partial(jax.jit, static_argnames=("stride", "padding"))
def complex_conv2d(x, w_re, b_re, w_im, b_im, *, stride=1, padding=0):
    """x: [B, 2, C_in, H, W] f32, weights OIHW (C_out, C_in, KH, KW), biases (C_out,).

    Returns [B, 2, C_out, Ho, Wo] (same layout as the PyTorch module).
    """
    # TODO(synk): general stride / dilation / groups not implemented.
    assert stride == 1, "only stride=1 implemented"
    B, two, C_in, H, W = x.shape
    assert two == 2
    C_out, _, KH, KW = w_re.shape

    Hp, Wp = H + 2 * padding, W + 2 * padding
    Ho, Wo = Hp - KH + 1, Wp - KW + 1
    K = KH * KW * 2 * C_in
    M = Ho * Wo
    Cpad = _round_up(2 * C_out, 128)

    vmem_limit, block_budget = _vmem_budget()
    TM = _choose_tile(M, K, Cpad, block_budget)
    M_pad = _round_up(M, TM)
    n_tiles = M_pad // TM

    # --- wrapper-side packing (layout plumbing, plain XLA ops, bf16 stream) ---
    # Channels-last padded input; real channels [0:C_in], imag [C_in:2*C_in].
    xc = x.astype(jnp.bfloat16).reshape(B, 2 * C_in, H, W)
    xp = jnp.pad(xc, ((0, 0), (0, 0), (padding, padding), (padding, padding)))
    xn = jnp.transpose(xp, (0, 2, 3, 1))                      # (B, Hp, Wp, 2*C_in)

    # im2col, tap-major along the contraction dim: k = (i*KW + j)*2*C_in + ch.
    # Folding all KH*KW taps into the contraction makes spatial tiling halo-free.
    patches = jnp.concatenate(
        [xn[:, i:i + Ho, j:j + Wo, :] for i in range(KH) for j in range(KW)],
        axis=-1,
    ).reshape(B, M, K)
    patches = jnp.pad(patches, ((0, 0), (0, M_pad - M), (0, 0)))

    # Packed complex weight as the (K, Cpad) MXU-stationary RHS:
    #   cols [0:C_out] -> real outputs, [C_out:2*C_out] -> imag outputs;
    #   row ordering matches the patch contraction ordering above.
    w_top = jnp.concatenate([w_re, -w_im], axis=1)            # real-output rows
    w_bot = jnp.concatenate([w_im, w_re], axis=1)             # imag-output rows
    w_all = jnp.concatenate([w_top, w_bot], axis=0)           # (2*C_out, 2*C_in, KH, KW)
    w_packed = jnp.transpose(w_all, (2, 3, 1, 0)).reshape(K, 2 * C_out)
    w_packed = jnp.pad(w_packed, ((0, 0), (0, Cpad - 2 * C_out))).astype(jnp.bfloat16)

    # Combined biases (kept f32): real += b_re - b_im ; imag += b_re + b_im.
    b_packed = jnp.concatenate([b_re - b_im, b_re + b_im])
    b_packed = jnp.pad(b_packed, (0, Cpad - 2 * C_out)).reshape(1, Cpad).astype(jnp.float32)

    out = pl.pallas_call(
        _complex_conv2d_gemm_kernel,
        out_shape=jax.ShapeDtypeStruct((B, M_pad, Cpad), jnp.float32),
        grid_spec=pltpu.PrefetchScalarGridSpec(
            num_scalar_prefetch=0,
            grid=(B, n_tiles),
            in_specs=[
                # TODO(synk): try pipeline_mode=pl.Buffered(3) here if an xprof
                # trace still shows exposed patches DMA after these changes.
                pl.BlockSpec((1, TM, K), lambda b, t: (b, t, 0)),
                pl.BlockSpec((K, Cpad), lambda b, t: (0, 0)),
                pl.BlockSpec((1, Cpad), lambda b, t: (0, 0)),
            ],
            out_specs=pl.BlockSpec((1, TM, Cpad), lambda b, t: (b, t, 0)),
        ),
        compiler_params=pltpu.CompilerParams(
            dimension_semantics=("parallel", "parallel"),
            vmem_limit_bytes=vmem_limit,
        ),
    )(patches, w_packed, b_packed)

    # Strip M / channel padding; (B, Ho*Wo, 2*C_out) -> (B, 2, C_out, Ho, Wo).
    out = out[:, :M, :2 * C_out].reshape(B, Ho, Wo, 2, C_out)
    return jnp.transpose(out, (0, 3, 4, 1, 2))


def _reference(x, w_re, b_re, w_im, b_im, padding):
    """Pure-JAX reference (lax conv, NCHW, f32) mirroring the PyTorch forward."""
    def conv(inp, w, b):
        y = jax.lax.conv_general_dilated(
            inp, w, window_strides=(1, 1),
            padding=((padding, padding), (padding, padding)),
            dimension_numbers=("NCHW", "OIHW", "NCHW"),
            precision=jax.lax.Precision.HIGHEST)
        return y + b[None, :, None, None]

    xr, xi = x[:, 0], x[:, 1]
    real = conv(xr, w_re, b_re) - conv(xi, w_im, b_im)
    imag = conv(xi, w_re, b_re) + conv(xr, w_im, b_im)
    return jnp.stack((real, imag), axis=1)


if __name__ == "__main__":
    B, C_in, C_out, H, W = 2, 4, 8, 16, 16
    KH = KW = 3
    padding = 1

    key = jax.random.PRNGKey(0)
    kx, kwr, kbr, kwi, kbi = jax.random.split(key, 5)

    x = jax.random.normal(kx, (B, 2, C_in, H, W), dtype=jnp.float32)

    fan_in = C_in * KH * KW
    scale = 1.0 / jnp.sqrt(jnp.float32(fan_in))
    w_re = jax.random.normal(kwr, (C_out, C_in, KH, KW), dtype=jnp.float32) * scale
    b_re = jax.random.normal(kbr, (C_out,), dtype=jnp.float32) * scale
    w_im = jax.random.normal(kwi, (C_out, C_in, KH, KW), dtype=jnp.float32) * scale
    b_im = jax.random.normal(kbi, (C_out,), dtype=jnp.float32) * scale

    out = complex_conv2d(x, w_re, b_re, w_im, b_im, stride=1, padding=padding)
    out = jax.block_until_ready(out)
    assert out.shape == (B, 2, C_out, H, W), out.shape

    ref = jax.block_until_ready(_reference(x, w_re, b_re, w_im, b_im, padding))
    # bf16 patch/weight stream (f32 accumulation) vs an f32 HIGHEST-precision
    # reference: tolerance loosened accordingly.
    assert jnp.allclose(out, ref, atol=3e-2, rtol=3e-2), (
        "mismatch vs reference conv, max abs err = %f"
        % float(jnp.max(jnp.abs(out - ref))))

    print("KERNEL_OK")
</pallas_src>

<mosaic_0001>
module attributes {stable_mosaic.version = 11 : i64} {
  func.func @_complex_conv2d_gemm_kernel(%arg0: i32, %arg1: i32, %arg2: memref<1x128x72xbf16, #tpu.memory_space<vmem>>, %arg3: memref<72x128xbf16, #tpu.memory_space<vmem>>, %arg4: memref<1x128xf32, #tpu.memory_space<vmem>>, %arg5: memref<1x128x128xf32, #tpu.memory_space<vmem>>) attributes {dimension_semantics = [#tpu.dimension_semantics<parallel>, #tpu.dimension_semantics<parallel>], iteration_bounds = array<i64: 2, 2>, scalar_prefetch = 0 : i64, scratch_operands = 0 : i64, tpu.core_type = #tpu.core_type<tc>, window_params = [{transform_indices = @transform_0, window_bounds = array<i64: 1, 128, 72>}, {pipeline_mode = #tpu.pipeline_mode<synchronous>, transform_indices = @transform_1, window_bounds = array<i64: 72, 128>}, {pipeline_mode = #tpu.pipeline_mode<synchronous>, transform_indices = @transform_2, window_bounds = array<i64: 1, 128>}, {transform_indices = @transform_3, window_bounds = array<i64: 1, 128, 128>}]} {
    %c0 = arith.constant 0 : index
    %c0_0 = arith.constant 0 : index
    %c0_1 = arith.constant 0 : index
    %0 = vector.load %arg2[%c0, %c0_0, %c0_1] : memref<1x128x72xbf16, #tpu.memory_space<vmem>>, vector<1x128x72xbf16>
    %1 = vector.shape_cast %0 : vector<1x128x72xbf16> to vector<128x72xbf16>
    %c0_2 = arith.constant 0 : index
    %c0_3 = arith.constant 0 : index
    %2 = vector.load %arg3[%c0_2, %c0_3] : memref<72x128xbf16, #tpu.memory_space<vmem>>, vector<72x128xbf16>
    %cst = arith.constant dense<0.000000e+00> : vector<128x128xf32>
    %3 = tpu.matmul %1, %2, %cst {dimension_numbers = #tpu.dot_dimension_numbers<[1], [0], [0], [1], [0, 0, 1, 1], [], []>} : vector<128x72xbf16>, vector<72x128xbf16>, vector<128x128xf32> -> vector<128x128xf32>
    %c0_4 = arith.constant 0 : index
    %c0_5 = arith.constant 0 : index
    %4 = vector.load %arg4[%c0_4, %c0_5] : memref<1x128xf32, #tpu.memory_space<vmem>>, vector<1x128xf32>
    %5 = vector.broadcast %4 : vector<1x128xf32> to vector<128x128xf32>
    %6 = arith.addf %3, %5 : vector<128x128xf32>
    %7 = vector.shape_cast %6 : vector<128x128xf32> to vector<1x128x128xf32>
    %c0_6 = arith.constant 0 : index
    %c0_7 = arith.constant 0 : index
    %c0_8 = arith.constant 0 : index
    %8 = vector.load %arg5[%c0_6, %c0_7, %c0_8] : memref<1x128x128xf32, #tpu.memory_space<vmem>>, vector<1x128x128xf32>
    tpu.vector_store %arg5[%c0_6, %c0_7, %c0_8], %7 {strides = array<i32>} : memref<1x128x128xf32, #tpu.memory_space<vmem>>, vector<1x128x128xf32>,
    return
  }
  func.func @transform_0(%arg0: i32, %arg1: i32) -> (i32, i32, i32) {
    %c0_i32 = arith.constant 0 : i32
    %c0_i32_0 = arith.constant 0 : i32
    return %arg0, %arg1, %c0_i32 : i32, i32, i32
  }
  func.func @transform_1(%arg0: i32, %arg1: i32) -> (i32, i32) {
    %c0_i32 = arith.constant 0 : i32
    %c0_i32_0 = arith.constant 0 : i32
    %c0_i32_1 = arith.constant 0 : i32
    return %c0_i32, %c0_i32_0 : i32, i32
  }
  func.func @transform_2(%arg0: i32, %arg1: i32) -> (i32, i32) {
    %c0_i32 = arith.constant 0 : i32
    %c0_i32_0 = arith.constant 0 : i32
    %c0_i32_1 = arith.constant 0 : i32
    return %c0_i32, %c0_i32_0 : i32, i32
  }
  func.func @transform_3(%arg0: i32, %arg1: i32) -> (i32, i32, i32) {
    %c0_i32 = arith.constant 0 : i32
    %c0_i32_0 = arith.constant 0 : i32
    return %arg0, %arg1, %c0_i32 : i32, i32, i32
  }
}

</mosaic_0001>

<llo_original>
// kernel: complex_conv2d.1
$region0: #{complex_conv2d.1}
  #allocation0 [shape = 'u32[]', space=smem, size = 0x4, offset = 0x4, fixed_abs, tag = 'smem constant byte address 0x4 - core index']
  #allocation1 [shape = 'u32[144,128]{1,0:T(1,128)}', space=vmem, size = 0x12000, scoped, tag = 'internal scratch']
  %s0 = inlined_call_operand.vmem [shape: bf16[2,256,72], index: 0, kind: input, shape index: {}]
  %s1 = inlined_call_operand.vmem [shape: bf16[72,128], index: 1, kind: input, shape index: {}]
  %s2 = inlined_call_operand.vmem [shape: f32[1,128], index: 2, kind: input, shape index: {}]
  %s3 = inlined_call_operand.vmem [shape: f32[2,256,128], index: 3, kind: output, shape index: {}]
  %s4 = sld [smem:[#allocation0]]
  $region45: #{complex_conv2d.1} parent=0
    _
  %s6 = ssub.s32 1, %s4
  %s7 = scalar_select 0, %s6, %s4
  loop: start=0, step=1, limit=6
  $region2: #{complex_conv2d.1} parent=0 // loop_pre_header
    _
  $region3: #{complex_conv2d.1} parent=0 // loop_header
    %s9 = sphi 0, %s13
    %p10 = scmp.ge.s32.totalorder %s9, 6
    %s16 = sphi 0, %s28
    %s17 = sphi 0, %s24
    %s18 = sphi 0, %s16
    %s19 = sphi 0, %s17
    %s20 = sphi 0, %s18
    %s21 = sphi 0, %s19
    %s33 = sphi 0, %s35
    %s36 = sphi 0, %s33
    %s37 = sphi 0, %s36
    %s53 = sphi 0, %s37
    %s57 = sphi 0, %s57
    %s59 = sphi 0, %s57
    %s60 = sphi 0, %s59
    %s74 = sphi 0, %s60
    %s78 = sphi 0, %s78
    %s80 = sphi 0, %s78
    %s81 = sphi 0, %s80
    %s95 = sphi 0, %s81
    %s103 = sphi 0, %s105
    %s106 = sphi 0, %s103
    %s107 = sphi 0, %s106
    %s123 = sphi 0, %s107
  $region4: #{complex_conv2d.1} parent=0 // loop_header_branch
    %12 = sbr.rel (%p10) target = $region8
  $region5: #{complex_conv2d.1} parent=0 // loop_body
    %s14 = ssub.s32 %s9, 1
    %s15 = ssub.s32 %s9, 2
    %s22 = sadd.s32 1, %s17
    %p23 = scmp.ge.s32.totalorder %s22, 2
    %s24 = scalar_select %p23, 0, %s22
    %s25 = sadd.s32 1, %s16
    %s26 = scalar_select %p23, %s25, %s16
    %p27 = scmp.ge.s32.totalorder %s26, 2
    %s28 = scalar_select %p27, 0, %s26
    %s29 = ssub.s32 %s16, %s28
    %s30 = ssub.s32 %s17, %s24
    %s31 = sor.u32 %s29, %s30
    %p32 = scmp.eq.s32.totalorder %s31, 0
    %s34 = sadd.s32 %s33, 1
    %s35 = scalar_select %p32, %s33, %s34
    %p38 = pneg %p32
    %p39 = scmp.eq.s32.totalorder %s9, 3
    %p40 = por %p38, %p39
    %p41 = scmp.ne.s32.totalorder %s33, %s36
    %p42 = scmp.eq.s32.totalorder %s9, 0
    %p43 = por %p41, %p42
    %p44 = scmp.ne.s32.totalorder %s33, %s36
    %p45 = scmp.eq.s32.totalorder %s14, 3
    %p46 = por %p44, %p45
    %p47 = scmp.ne.s32.totalorder %s36, %s37
    %p48 = scmp.eq.s32.totalorder %s14, 0
    %p49 = por %p47, %p48
    %p50 = scmp.ne.s32.totalorder %s36, %s37
    %p51 = scmp.eq.s32.totalorder %s15, 3
    %p52 = por %p50, %p51
    %p54 = scmp.ne.s32.totalorder %s37, %s53
    %p55 = scmp.eq.s32.totalorder %s15, 0
    %p56 = por %p54, %p55
    %s58 = sadd.s32 %s57, 1
    %p61 = scmp.eq.s32.totalorder %s9, 3
    %p62 = scmp.ne.s32.totalorder %s57, %s59
    %p63 = scmp.eq.s32.totalorder %s9, 0
    %p64 = por %p62, %p63
    %p65 = scmp.ne.s32.totalorder %s57, %s59
    %p66 = scmp.eq.s32.totalorder %s14, 3
    %p67 = por %p65, %p66
    %p68 = scmp.ne.s32.totalorder %s59, %s60
    %p69 = scmp.eq.s32.totalorder %s14, 0
    %p70 = por %p68, %p69
    %p71 = scmp.ne.s32.totalorder %s59, %s60
    %p72 = scmp.eq.s32.totalorder %s15, 3
    %p73 = por %p71, %p72
    %p75 = scmp.ne.s32.totalorder %s60, %s74
    %p76 = scmp.eq.s32.totalorder %s15, 0
    %p77 = por %p75, %p76
    %s79 = sadd.s32 %s78, 1
    %p82 = scmp.eq.s32.totalorder %s9, 3
    %p83 = scmp.ne.s32.totalorder %s78, %s80
    %p84 = scmp.eq.s32.totalorder %s9, 0
    %p85 = por %p83, %p84
    %p86 = scmp.ne.s32.totalorder %s78, %s80
    %p87 = scmp.eq.s32.totalorder %s14, 3
    %p88 = por %p86, %p87
    %p89 = scmp.ne.s32.totalorder %s80, %s81
    %p90 = scmp.eq.s32.totalorder %s14, 0
    %p91 = por %p89, %p90
    %p92 = scmp.ne.s32.totalorder %s80, %s81
    %p93 = scmp.eq.s32.totalorder %s15, 3
    %p94 = por %p92, %p93
    %p96 = scmp.ne.s32.totalorder %s81, %s95
    %p97 = scmp.eq.s32.totalorder %s15, 0
    %p98 = por %p96, %p97
    %s99 = ssub.s32 %s16, %s28
    %s100 = ssub.s32 %s17, %s24
    %s101 = sor.u32 %s99, %s100
    %p102 = scmp.eq.s32.totalorder %s101, 0
    %s104 = sadd.s32 %s103, 1
    %s105 = scalar_select %p102, %s103, %s104
    %p108 = pneg %p102
    %p109 = scmp.eq.s32.totalorder %s9, 3
    %p110 = por %p108, %p109
    %p111 = scmp.ne.s32.totalorder %s103, %s106
    %p112 = scmp.eq.s32.totalorder %s9, 0
    %p113 = por %p111, %p112
    %p114 = scmp.ne.s32.totalorder %s103, %s106
    %p115 = scmp.eq.s32.totalorder %s14, 3
    %p116 = por %p114, %p115
    %p117 = scmp.ne.s32.totalorder %s106, %s107
    %p118 = scmp.eq.s32.totalorder %s14, 0
    %p119 = por %p117, %p118
    %p120 = scmp.ne.s32.totalorder %s106, %s107
    %p121 = scmp.eq.s32.totalorder %s15, 3
    %p122 = por %p120, %p121
    %p124 = scmp.ne.s32.totalorder %s107, %s123
    %p125 = scmp.eq.s32.totalorder %s15, 0
    %p126 = por %p124, %p125
    %p127 = scmp.le.s32.totalorder 1, %s9
    %p128 = scmp.lt.s32.totalorder %s9, 5
    %p129 = pnand %p127, %p128
    %p130 = pneg %p129
    // Predicated region
    $region9: #{complex_conv2d.1} parent=5 // pred_check
      _
    $region10: #{complex_conv2d.1} parent=5 // pred_check_branch
      %132 = sbr.rel (%p129) target = $region12
    $region11: #{complex_conv2d.1} parent=5 // pred_region
      %s133 = ssub.s32 %s9, 1
      // Predicated region
      $region13: #{complex_conv2d.1} parent=11 // pred_check
        %p134 = pneg %p70
      $region14: #{complex_conv2d.1} parent=11 // pred_check_branch
        %136 = sbr.rel (%p134) target = $region16
      $region15: #{complex_conv2d.1} parent=11 // pred_region
        _
      $region16: #{complex_conv2d.1} parent=11 // pred_fallthru
        _
      // Predicated region
      $region17: #{complex_conv2d.1} parent=11 // pred_check
        %p137 = pneg %p91
      $region18: #{complex_conv2d.1} parent=11 // pred_check_branch
        %139 = sbr.rel (%p137) target = $region20
      $region19: #{complex_conv2d.1} parent=11 // pred_region
        _
      $region20: #{complex_conv2d.1} parent=11 // pred_fallthru
        _
    $region12: #{complex_conv2d.1} parent=5 // pred_fallthru
      _
    %p140 = scmp.lt.s32.totalorder %s9, 4
    // Predicated region
    $region21: #{complex_conv2d.1} parent=5 // pred_check
      %p141 = pneg %p140
    $region22: #{complex_conv2d.1} parent=5 // pred_check_branch
      %143 = sbr.rel (%p141) target = $region24
    $region23: #{complex_conv2d.1} parent=5 // pred_region
      // Predicated region
      $region25: #{complex_conv2d.1} parent=23 // pred_check
        %p144 = pneg %p43
      $region26: #{complex_conv2d.1} parent=23 // pred_check_branch
        %146 = sbr.rel (%p144) target = $region28
      $region27: #{complex_conv2d.1} parent=23 // pred_region
        %s147 = smul.u32 16, %s17
        %p148 = scmp.lt.s32.totalorder %s16, 1
        %s149 = scalar_select %p148, %s16, 1
        %p150 = scmp.lt.s32.totalorder %s147, 31
        %s151 = scalar_select %p150, %s147, 31
        %s152 = smul.addr %s149, 32
        %s153 = sadd.s32 %s151, %s152
        %s154 = smul.addr %s153, 4
        %s155 = scalar_lea.vmem %s0, %s154
        %s156 = smul.u32 16, %s17
      $region28: #{complex_conv2d.1} parent=23 // pred_fallthru
        _
    $region24: #{complex_conv2d.1} parent=5 // pred_fallthru
      _
    %p157 = scmp.le.s32.totalorder 1, %s9
    %p158 = scmp.lt.s32.totalorder %s9, 5
    %p159 = pnand %p157, %p158
    %p160 = pneg %p159
    // Predicated region
    $region29: #{complex_conv2d.1} parent=5 // pred_check
      _
    $region30: #{complex_conv2d.1} parent=5 // pred_check_branch
      %162 = sbr.rel (%p159) target = $region32
    $region31: #{complex_conv2d.1} parent=5 // pred_region
      %s163 = ssub.s32 %s9, 1
      %s164 = smul.u32 16, %s19
      %p165 = scmp.lt.s32.totalorder %s18, 1
      %s166 = scalar_select %p165, %s18, 1
      %p167 = scmp.lt.s32.totalorder %s164, 31
      %s168 = scalar_select %p167, %s164, 31
      %s169 = smul.addr %s166, 32
      %s170 = sadd.s32 %s168, %s169
      %s171 = smul.addr %s170, 4
      %s172 = scalar_lea.vmem %s0, %s171
      %p173 = pneg %p49
      %p174 = pneg %p46
      %p175 = pneg %p70
      %p176 = pneg %p67
      %p177 = pneg %p91
      %p178 = pneg %p88
      %p179 = pneg %p119
      %p180 = pneg %p116
      %s181 = smul.u32 16, %s19
      %p182 = scmp.lt.s32.totalorder %s18, 1
      %s183 = scalar_select %p182, %s18, 1
      %p184 = scmp.lt.s32.totalorder %s181, 31
      %s185 = scalar_select %p184, %s181, 31
      %s186 = smul.addr %s183, 32
      %s187 = sadd.s32 %s185, %s186
      %s188 = smul.addr %s187, 8
      %s189 = scalar_lea.vmem %s3, %s188
      %s190 = smul.u32 16, %s19
      %p191 = scmp.lt.s32.totalorder %s18, 1
      %s192 = scalar_select %p191, %s18, 1
      %p193 = scmp.lt.s32.totalorder %s190, 31
      %s194 = scalar_select %p193, %s190, 31
      %s195 = smul.addr %s192, 32
      %s196 = sadd.s32 %s194, %s195
      %s197 = smul.addr %s196, 4
      %s198 = scalar_lea.vmem %s0, %s197
      %s199 = smul.u32 16, %s19
      %s200 = smul.u32 16, %s19
      %p201 = scmp.lt.s32.totalorder %s18, 1
      %s202 = scalar_select %p201, %s18, 1
      %p203 = scmp.lt.s32.totalorder %s200, 31
      %s204 = scalar_select %p203, %s200, 31
      %s205 = smul.addr %s202, 32
      %s206 = sadd.s32 %s204, %s205
      %s207 = smul.addr %s206, 8
      %s208 = scalar_lea.vmem %s3, %s207
      %s209 = smul.u32 16, %s19
      %v211 = vld [vmem:[%s198] sm:$0xf]
      %v212 = vld [vmem:[%s198 + $0x4] sm:$0xf]
      %v213 = vld [vmem:[%s198 + $0x8] sm:$0xf]
      %v214 = vld [vmem:[%s198 + $0xc] sm:$0xf]
      %v215 = vld [vmem:[%s198 + $0x10] sm:$0xf]
      %v216 = vld [vmem:[%s198 + $0x14] sm:$0xf]
      %v217 = vld [vmem:[%s198 + $0x18] sm:$0xf]
      %v218 = vld [vmem:[%s198 + $0x1c] sm:$0xf]
      %v219 = vld [vmem:[%s198 + $0x20] sm:$0xf]
      %v220 = vld [vmem:[%s198 + $0x24] sm:$0xf]
      %v221 = vld [vmem:[%s198 + $0x28] sm:$0xf]
      %v222 = vld [vmem:[%s198 + $0x2c] sm:$0xf]
      %v223 = vld [vmem:[%s198 + $0x30] sm:$0xf]
      %v224 = vld [vmem:[%s198 + $0x34] sm:$0xf]
      %v225 = vld [vmem:[%s198 + $0x38] sm:$0xf]
      %v226 = vld [vmem:[%s198 + $0x3c] sm:$0xf]
      %v227 = vld [vmem:[%s1] sm:$0xf]
      %v228 = vld [vmem:[%s1 + $0x4] sm:$0xf]
      %v229 = vld [vmem:[%s1 + $0x8] sm:$0xf]
      %v230 = vld [vmem:[%s1 + $0xc] sm:$0xf]
      %v231 = vld [vmem:[%s1 + $0x10] sm:$0xf]
      %v232 = vld [vmem:[%s1 + $0x14] sm:$0xf]
      %v233 = vld [vmem:[%s1 + $0x18] sm:$0xf]
      %v234 = vld [vmem:[%s1 + $0x1c] sm:$0xf]
      %v235 = vld [vmem:[%s1 + $0x20] sm:$0xf]
      %v236 = vld [vmem:[%s2] sm:$0x1]
      %v238 = vlaneseq
      %v239 = vshrl.u32 %v238, 7
      %v240 = vsub.s32 0, %v239
      %v241 = vrot.slane %v236, %v240
      %v259 = vunpack.c.l.b16 %v211
      %v260 = vunpack.c.l.b16 %v212
      %v261 = vunpack.c.l.b16 %v213
      %v262 = vunpack.c.l.b16 %v214
      %v263 = vunpack.c.l.b16 %v215
      %v264 = vunpack.c.l.b16 %v216
      %v265 = vunpack.c.l.b16 %v217
      %v266 = vunpack.c.l.b16 %v218
      %v267 = vunpack.c.l.b16 %v219
      %v268 = vunpack.c.l.b16 %v220
      %v269 = vunpack.c.l.b16 %v221
      %v270 = vunpack.c.l.b16 %v222
      %v271 = vunpack.c.l.b16 %v223
      %v272 = vunpack.c.l.b16 %v224
      %v273 = vunpack.c.l.b16 %v225
      %v274 = vunpack.c.l.b16 %v226
      %v275 = vpack.c.b16 %v260, %v259
      %v276 = vpack.c.b16 %v262, %v261
      %v277 = vpack.c.b16 %v264, %v263
      %v278 = vpack.c.b16 %v266, %v265
      %v279 = vpack.c.b16 %v268, %v267
      %v280 = vpack.c.b16 %v270, %v269
      %v281 = vpack.c.b16 %v272, %v271
      %v282 = vpack.c.b16 %v274, %v273
      %v292 = vunpack.c.l.b16 %v227
      %v293 = vunpack.c.l.b16 %v228
      %v294 = vunpack.c.l.b16 %v229
      %v295 = vunpack.c.l.b16 %v230
      %v296 = vunpack.c.l.b16 %v231
      %v297 = vunpack.c.l.b16 %v232
      %v298 = vunpack.c.l.b16 %v233
      %v299 = vunpack.c.l.b16 %v234
      %v300 = vunpack.c.l.b16 %v235
      %v301 = vpack.c.b16 %v293, %v292
      %v302 = vpack.c.b16 %v295, %v294
      %v303 = vpack.c.b16 %v297, %v296
      %v304 = vpack.c.b16 %v299, %v298
      %v305 = vpack.c.b16 %v300, %v300
      %vm310 = vcmask 588800
      %v312 = vsel %vm310, %v275, 0
      %v315 = vsel %vm310, %v276, 0
      %v318 = vsel %vm310, %v277, 0
      %v321 = vsel %vm310, %v278, 0
      %v324 = vsel %vm310, %v279, 0
      %v327 = vsel %vm310, %v280, 0
      %v330 = vsel %vm310, %v281, 0
      %v333 = vsel %vm310, %v282, 0
      %vm335 = vcmask 1043456
      %v337 = vsel %vm335, %v305, 0
      %339 = vmatprep.subr.bf16.mxu0 0
      %340 = vmatpush1.bf16.msra.mxu0 0
      %341 = vmatprep.subr.bf16.mxu0 0
      %342 = vmatpush1.bf16.msra.mxu0 0
      %343 = vmatprep.subr.bf16.mxu0 0
      %344 = vmatpush1.bf16.msra.mxu0 0
      %345 = vmatprep.subr.bf16.mxu0 0
      %346 = vmatpush1.bf16.msra.mxu0 %v337
      %347 = vmatprep.subr.bf16.mxu0 0
      %348 = vmatpush1.bf16.msra.mxu0 %v304
      %349 = vmatprep.subr.bf16.mxu0 0
      %350 = vmatpush1.bf16.msra.mxu0 %v303
      %351 = vmatprep.subr.bf16.mxu0 0
      %352 = vmatpush1.bf16.msra.mxu0 %v302
      %353 = vmatprep.subr.bf16.mxu0 0
      %354 = vmatpush1.bf16.msra.mxu0 %v301
      %355 = vmatprep.subr.bf16.mxu0 0
      %356 = vmatpush2.bf16.msra.mxu0 0
      %357 = vmatprep.subr.bf16.mxu0 0
      %358 = vmatpush2.bf16.msra.mxu0 0
      %359 = vmatprep.subr.bf16.mxu0 0
      %360 = vmatpush2.bf16.msra.mxu0 0
      %361 = vmatprep.subr.bf16.mxu0 0
      %362 = vmatpush2.bf16.msra.mxu0 0
      %363 = vmatprep.subr.bf16.mxu0 0
      %364 = vmatpush2.bf16.msra.mxu0 0
      %365 = vmatprep.subr.bf16.mxu0 0
      %366 = vmatpush2.bf16.msra.mxu0 0
      %367 = vmatprep.subr.bf16.mxu0 0
      %368 = vmatpush2.bf16.msra.mxu0 0
      %369 = vmatprep.subr.bf16.mxu0 0
      %370 = vmatpush2.bf16.msra.mxu0 0
      %371 = vmatprep.mubr.bf16.mxu0 0
      %372 = vmatmul.mubr.bf16.gmra.mxu0 %v312
      %v373 = vpop.f32.mrf.mxu0
      %v374 = vadd.f32 %v241, %v373
      %v375 = vpop.f32.mrf.mxu0
      %v376 = vpop.f32.mrf.mxu0
      %v377 = vadd.f32 %v241, %v376
      %v378 = vpop.f32.mrf.mxu0
      %379 = vmatprep.mubr.bf16.mxu0 0
      %380 = vmatmul.mubr.bf16.gmra.mxu0 %v315
      %v381 = vpop.f32.mrf.mxu0
      %v382 = vadd.f32 %v241, %v381
      %v383 = vpop.f32.mrf.mxu0
      %v384 = vpop.f32.mrf.mxu0
      %v385 = vadd.f32 %v241, %v384
      %v386 = vpop.f32.mrf.mxu0
      %387 = vmatprep.mubr.bf16.mxu0 0
      %388 = vmatmul.mubr.bf16.gmra.mxu0 %v318
      %v389 = vpop.f32.mrf.mxu0
      %v390 = vadd.f32 %v241, %v389
      %v391 = vpop.f32.mrf.mxu0
      %v392 = vpop.f32.mrf.mxu0
      %v393 = vadd.f32 %v241, %v392
      %v394 = vpop.f32.mrf.mxu0
      %395 = vmatprep.mubr.bf16.mxu0 0
      %396 = vmatmul.mubr.bf16.gmra.mxu0 %v321
      %v397 = vpop.f32.mrf.mxu0
      %v398 = vadd.f32 %v241, %v397
      %v399 = vpop.f32.mrf.mxu0
      %v400 = vpop.f32.mrf.mxu0
      %v401 = vadd.f32 %v241, %v400
      %v402 = vpop.f32.mrf.mxu0
      %403 = vmatprep.mubr.bf16.mxu0 0
      %404 = vmatmul.mubr.bf16.gmra.mxu0 %v324
      %v405 = vpop.f32.mrf.mxu0
      %v406 = vadd.f32 %v241, %v405
      %v407 = vpop.f32.mrf.mxu0
      %v408 = vpop.f32.mrf.mxu0
      %v409 = vadd.f32 %v241, %v408
      %v410 = vpop.f32.mrf.mxu0
      %411 = vmatprep.mubr.bf16.mxu0 0
      %412 = vmatmul.mubr.bf16.gmra.mxu0 %v327
      %v413 = vpop.f32.mrf.mxu0
      %v414 = vadd.f32 %v241, %v413
      %v415 = vpop.f32.mrf.mxu0
      %v416 = vpop.f32.mrf.mxu0
      %v417 = vadd.f32 %v241, %v416
      %v418 = vpop.f32.mrf.mxu0
      %419 = vmatprep.mubr.bf16.mxu0 0
      %420 = vmatmul.mubr.bf16.gmra.mxu0 %v330
      %v421 = vpop.f32.mrf.mxu0
      %v422 = vadd.f32 %v241, %v421
      %v423 = vpop.f32.mrf.mxu0
      %v424 = vpop.f32.mrf.mxu0
      %v425 = vadd.f32 %v241, %v424
      %v426 = vpop.f32.mrf.mxu0
      %427 = vmatprep.mubr.bf16.mxu0 0
      %428 = vmatmul.mubr.bf16.gmra.mxu0 %v333
      %v429 = vpop.f32.mrf.mxu0
      %v430 = vadd.f32 %v241, %v429
      %v431 = vpop.f32.mrf.mxu0
      %v432 = vpop.f32.mrf.mxu0
      %v433 = vadd.f32 %v241, %v432
      %v434 = vpop.f32.mrf.mxu0
      %435 = vdwg.mxu0
      %436 = vst [vmem:[%s208] sm:$0xff] %v374
      %437 = vst [vmem:[%s208 + $0x8] sm:$0xff] %v377
      %438 = vst [vmem:[%s208 + $0x10] sm:$0xff] %v382
      %439 = vst [vmem:[%s208 + $0x18] sm:$0xff] %v385
      %440 = vst [vmem:[%s208 + $0x20] sm:$0xff] %v390
      %441 = vst [vmem:[%s208 + $0x28] sm:$0xff] %v393
      %442 = vst [vmem:[%s208 + $0x30] sm:$0xff] %v398
      %443 = vst [vmem:[%s208 + $0x38] sm:$0xff] %v401
      %444 = vst [vmem:[%s208 + $0x40] sm:$0xff] %v406
      %445 = vst [vmem:[%s208 + $0x48] sm:$0xff] %v409
      %446 = vst [vmem:[%s208 + $0x50] sm:$0xff] %v414
      %447 = vst [vmem:[%s208 + $0x58] sm:$0xff] %v417
      %448 = vst [vmem:[%s208 + $0x60] sm:$0xff] %v422
      %449 = vst [vmem:[%s208 + $0x68] sm:$0xff] %v425
      %450 = vst [vmem:[%s208 + $0x70] sm:$0xff] %v430
      %451 = vst [vmem:[%s208 + $0x78] sm:$0xff] %v433
      %s452 = smul.u32 16, %s19
      %p453 = scmp.lt.s32.totalorder %s18, 1
      %s454 = scalar_select %p453, %s18, 1
      %p455 = scmp.lt.s32.totalorder %s452, 31
      %s456 = scalar_select %p455, %s452, 31
      %s457 = smul.addr %s454, 32
      %s458 = sadd.s32 %s456, %s457
      %s459 = smul.addr %s458, 8
      %s460 = scalar_lea.vmem %s3, %s459
      // Predicated region
      $region33: #{complex_conv2d.1} parent=31 // pred_check
        %p461 = pneg %p116
      $region34: #{complex_conv2d.1} parent=31 // pred_check_branch
        %463 = sbr.rel (%p461) target = $region36
      $region35: #{complex_conv2d.1} parent=31 // pred_region
        %s464 = smul.u32 16, %s19
      $region36: #{complex_conv2d.1} parent=31 // pred_fallthru
        _
    $region32: #{complex_conv2d.1} parent=5 // pred_fallthru
      _
    %p465 = scmp.le.s32.totalorder 2, %s9
    // Predicated region
    $region37: #{complex_conv2d.1} parent=5 // pred_check
      %p466 = pneg %p465
    $region38: #{complex_conv2d.1} parent=5 // pred_check_branch
      %468 = sbr.rel (%p466) target = $region40
    $region39: #{complex_conv2d.1} parent=5 // pred_region
      %s469 = ssub.s32 %s9, 2
      // Predicated region
      $region41: #{complex_conv2d.1} parent=39 // pred_check
        %p470 = pneg %p122
      $region42: #{complex_conv2d.1} parent=39 // pred_check_branch
        %472 = sbr.rel (%p470) target = $region44
      $region43: #{complex_conv2d.1} parent=39 // pred_region
        %s473 = smul.u32 16, %s21
        %p474 = scmp.lt.s32.totalorder %s20, 1
        %s475 = scalar_select %p474, %s20, 1
        %p476 = scmp.lt.s32.totalorder %s473, 31
        %s477 = scalar_select %p476, %s473, 31
        %s478 = smul.addr %s475, 32
        %s479 = sadd.s32 %s477, %s478
        %s480 = smul.addr %s479, 8
        %s481 = scalar_lea.vmem %s3, %s480
      $region44: #{complex_conv2d.1} parent=39 // pred_fallthru
        _
    $region40: #{complex_conv2d.1} parent=5 // pred_fallthru
      _
  $region6: #{complex_conv2d.1} parent=0 // loop_footer
    %s13 = sadd.s32 1, %s9
  $region7: #{complex_conv2d.1} parent=0 // loop_footer_branch
    %8 = sbr.rel target = $region3
  $region8: #{complex_conv2d.1} parent=0 // loop_exit
    _

</llo_original>
